<compile_context>
chip_gen: v6e
topology: v6e:2x2x1
jax: 0.10.0
libtpu: 0.0.40
codegen_flags: <defaults>
</compile_context>

<pallas_src>
import math
import functools

import jax
import jax.numpy as jnp
import numpy as np
from jax.experimental import pallas as pl
from jax.experimental.pallas import tpu as pltpu


def _commachine_kernel(x_ref, w_ref, outw_ref, o_ref, *, activ):
    """One batch tile.

    x_ref    : (TB, N_k)  inputs in native layout (contiguous slab per step)
    w_ref    : (N_k, K)   committee weights^T with 1/sqrt(N_k) pre-folded
    outw_ref : (1, K)     output weights with 1/sqrt(K) pre-folded (f32)
    o_ref    : (TB, 1)    output column for this batch tile
    """
    # Stage 1: committee pre-activations on the MXU, f32 accumulate.
    h = jnp.dot(x_ref[...], w_ref[...], preferred_element_type=jnp.float32)  # (TB, K)
    if activ == "ReLU":
        h = jnp.maximum(h, 0.0)
    else:  # Tanh
        h = jnp.tanh(h)

    # Stage 2: K-reduction (K is tiny) -- VPU mul + lane reduce -> (TB, 1).
    z = jnp.sum(h * outw_ref[...], axis=-1, keepdims=True)
    if activ == "Tanh":
        z = jnp.tanh(z)
    o_ref[...] = z.astype(o_ref.dtype)


def _round_up(v, m):
    return ((v + m - 1) // m) * m


def commachine_forward(
    x,
    committees,
    output,
    activ="ReLU",
    compute_dtype=None,
    force_pallas=False,
    small_batch_threshold=256,
):
    """x: (B, 1, N_k) or (B, N_k); committees: (1, K, N_k); output: (1, K).

    compute_dtype: optionally cast x / committee weights (e.g. jnp.bfloat16 on
    v6e / v7x); accumulation and the epilogue stay f32.  Returns (B, 1).
    """
    x2 = x.reshape(x.shape[0], x.shape[-1]) if x.ndim == 3 else x
    B, N_k = x2.shape
    K = committees.shape[-2]
    out_dtype = x2.dtype

    # One-time static fold of the 1/sqrt scales into the (tiny) weights, in f32.
    w = committees.reshape(K, N_k).astype(jnp.float32) * (1.0 / math.sqrt(N_k))
    outw = output.reshape(1, K).astype(jnp.float32) * (1.0 / math.sqrt(K))

    if not force_pallas and B <= small_batch_threshold:
        # Tiny batch: pallas_call launch overhead dominates; let XLA fuse it.
        h = jnp.dot(x2.astype(jnp.float32), w.T)
        h = jnp.maximum(h, 0.0) if activ == "ReLU" else jnp.tanh(h)
        z = jnp.sum(h * outw, axis=-1, keepdims=True)
        if activ == "Tanh":
            z = jnp.tanh(z)
        return z.astype(out_dtype)

    # Cast BEFORE any padding copy so any extra pass runs at compute width.
    if compute_dtype is not None:
        x2 = x2.astype(compute_dtype)
    wT = w.T.astype(compute_dtype if compute_dtype is not None else jnp.float32)  # (N_k, K)

    x_itemsize = jnp.dtype(x2.dtype).itemsize
    w_itemsize = jnp.dtype(wT.dtype).itemsize
    out_itemsize = jnp.dtype(out_dtype).itemsize
    sublane = 8 * max(1, 4 // x_itemsize)  # 8 for f32, 16 for bf16, 32 for 8-bit

    # --- batch-tile selection --------------------------------------------------
    # Double-buffered x tile + output tile + (double-buffered) resident weights
    # must fit under the smallest default scoped-VMEM budget (v5e: 16 MiB), so
    # the same tiling compiles on v5e / v6e / v7x.
    # TODO(synk): pipeline_mode=pl.Buffered(1) on the constant-index weight specs
    # would halve their footprint; budgeted for double-buffering here instead.
    weights_bytes = 2 * (N_k * K * w_itemsize + K * 4)
    vmem_data_budget = 14 * (1 << 20)
    tb_cap_vmem = (vmem_data_budget - weights_bytes) // (
        2 * (N_k * x_itemsize + out_itemsize)
    )
    target_tile_bytes = 1 << 20  # ~1 MiB contiguous x slab per grid step
    tb_target = target_tile_bytes // (N_k * x_itemsize)
    tb_cap = int(max(sublane, (min(tb_cap_vmem, tb_target) // sublane) * sublane))
    # TODO(synk): if N_k ever grows so large that even TB=sublane overflows VMEM,
    # add a trailing "arbitrary" N_k-reduction grid axis with an f32 VMEM
    # accumulator instead of shrinking TB further.

    B_aligned = _round_up(B, sublane)
    num_tiles = pl.cdiv(B_aligned, tb_cap)
    if B_aligned >= 2 * sublane:
        num_tiles = max(2, num_tiles)  # >= 2 steps: shard across v7x's 2 TCs
        if num_tiles % 2:
            num_tiles += 1             # even step count balances the cores
    TB = _round_up(pl.cdiv(B, num_tiles), sublane)
    B_pad = num_tiles * TB

    if B_pad != B:
        x2 = jnp.pad(x2, ((0, B_pad - B), (0, 0)))

    flops = 2 * B_pad * K * N_k + 2 * B_pad * K
    transcendentals = (B_pad * K + B_pad) if activ == "Tanh" else 0
    bytes_accessed = (
        B_pad * N_k * x_itemsize + N_k * K * w_itemsize + K * 4 + B_pad * out_itemsize
    )

    kernel = functools.partial(_commachine_kernel, activ=activ)
    out_col = pl.pallas_call(
        kernel,
        out_shape=jax.ShapeDtypeStruct((B_pad, 1), out_dtype),
        grid_spec=pl.GridSpec(
            grid=(num_tiles,),
            in_specs=[
                pl.BlockSpec((TB, N_k), lambda i: (i, 0)),  # streamed x tiles
                pl.BlockSpec((N_k, K), lambda i: (0, 0)),   # resident committees^T
                pl.BlockSpec((1, K), lambda i: (0, 0)),     # resident output weights
            ],
            out_specs=pl.BlockSpec((TB, 1), lambda i: (i, 0)),
        ),
        compiler_params=pltpu.CompilerParams(
            dimension_semantics=("parallel",),
            vmem_limit_bytes=32 * (1 << 20),
        ),
        cost_estimate=pl.CostEstimate(
            flops=flops,
            transcendentals=transcendentals,
            bytes_accessed=bytes_accessed,
        ),
    )(x2, wT, outw)

    # Padded rows produce 0 through both stages and are sliced off here.
    return out_col[:B]


def _reference(x, committees, output, activ="ReLU"):
    N_k = committees.shape[-1]
    K = committees.shape[-2]
    h = (committees * x).sum(axis=-1) / math.sqrt(N_k)  # (B, K)
    h = jnp.maximum(h, 0.0) if activ == "ReLU" else jnp.tanh(h)
    z = (output * h).sum(axis=-1) / math.sqrt(K)        # (B,)
    if activ == "Tanh":
        z = jnp.tanh(z)
    return z.reshape(-1, 1)


if __name__ == "__main__":
    N_k = 32
    K = 8

    key = jax.random.PRNGKey(0)
    k_w, k_x1, k_x2 = jax.random.split(key, 3)

    # Deterministic parameter init (mirrors shapes/scale of the torch module).
    committees = (2.0 / math.sqrt(N_k)) * (
        jax.random.uniform(k_w, (1, K, N_k), dtype=jnp.float32) - 0.5
    )
    out_relu = jnp.concatenate(
        [jnp.ones((1, K // 2), jnp.float32), -jnp.ones((1, K // 2), jnp.float32)],
        axis=1,
    )
    out_tanh = jnp.ones((1, K), jnp.float32)

    x_small = jax.random.normal(k_x1, (8, 1, N_k), dtype=jnp.float32)
    x_big = jax.random.normal(k_x2, (300, 1, N_k), dtype=jnp.float32)

    # f32 Pallas path, both activation variants, tiny batch (grid=(1,)).
    for activ, outw in (("ReLU", out_relu), ("Tanh", out_tanh)):
        got = jax.block_until_ready(
            commachine_forward(x_small, committees, outw, activ=activ, force_pallas=True)
        )
        ref = _reference(x_small, committees, outw, activ=activ)
        np.testing.assert_allclose(np.asarray(got), np.asarray(ref), rtol=1e-5, atol=1e-5)
        assert got.shape == (8, 1)

    # f32 Pallas path with batch padding and a 2-step "parallel" grid.
    got = jax.block_until_ready(
        commachine_forward(x_big, committees, out_relu, activ="ReLU")
    )
    ref_big = _reference(x_big, committees, out_relu, activ="ReLU")
    np.testing.assert_allclose(np.asarray(got), np.asarray(ref_big), rtol=1e-5, atol=1e-5)
    assert got.shape == (300, 1)

    # bf16 compute / f32 accumulation (v6e / v7x MXU path), looser tolerance.
    got_bf16 = jax.block_until_ready(
        commachine_forward(
            x_big, committees, out_relu, activ="ReLU", compute_dtype=jnp.bfloat16
        )
    )
    np.testing.assert_allclose(
        np.asarray(got_bf16), np.asarray(ref_big), rtol=5e-2, atol=5e-2
    )

    # Small-batch XLA fast path (pallas_call launch overhead dominates tiny B).
    got_xla = jax.block_until_ready(
        commachine_forward(x_small, committees, out_tanh, activ="Tanh")
    )
    ref = _reference(x_small, committees, out_tanh, activ="Tanh")
    np.testing.assert_allclose(np.asarray(got_xla), np.asarray(ref), rtol=1e-5, atol=1e-5)

    print("KERNEL_OK")
</pallas_src>

<mosaic_0001>
module attributes {stable_mosaic.version = 11 : i64} {
  func.func @_commachine_kernel(%arg0: i32, %arg1: memref<8x32xf32, #tpu.memory_space<vmem>>, %arg2: memref<32x8xf32, #tpu.memory_space<vmem>>, %arg3: memref<1x8xf32, #tpu.memory_space<vmem>>, %arg4: memref<8x1xf32, #tpu.memory_space<vmem>>) attributes {dimension_semantics = [#tpu.dimension_semantics<parallel>], iteration_bounds = array<i64: 1>, scalar_prefetch = 0 : i64, scratch_operands = 0 : i64, tpu.core_type = #tpu.core_type<tc>, window_params = [{transform_indices = @transform_0, window_bounds = array<i64: 8, 32>}, {pipeline_mode = #tpu.pipeline_mode<synchronous>, transform_indices = @transform_1, window_bounds = array<i64: 32, 8>}, {pipeline_mode = #tpu.pipeline_mode<synchronous>, transform_indices = @transform_2, window_bounds = array<i64: 1, 8>}, {transform_indices = @transform_3, window_bounds = array<i64: 8, 1>}]} {
    %c0 = arith.constant 0 : index
    %c0_0 = arith.constant 0 : index
    %0 = vector.load %arg1[%c0, %c0_0] : memref<8x32xf32, #tpu.memory_space<vmem>>, vector<8x32xf32>
    %c0_1 = arith.constant 0 : index
    %c0_2 = arith.constant 0 : index
    %1 = vector.load %arg2[%c0_1, %c0_2] : memref<32x8xf32, #tpu.memory_space<vmem>>, vector<32x8xf32>
    %cst = arith.constant dense<0.000000e+00> : vector<8x8xf32>
    %2 = tpu.matmul %0, %1, %cst {dimension_numbers = #tpu.dot_dimension_numbers<[1], [0], [0], [1], [0, 0, 1, 1], [], []>} : vector<8x32xf32>, vector<32x8xf32>, vector<8x8xf32> -> vector<8x8xf32>
    %cst_3 = arith.constant 0.000000e+00 : f32
    %3 = vector.broadcast %cst_3 : f32 to vector<8x8xf32>
    %4 = arith.maximumf %2, %3 : vector<8x8xf32>
    %c0_4 = arith.constant 0 : index
    %c0_5 = arith.constant 0 : index
    %5 = vector.load %arg3[%c0_4, %c0_5] : memref<1x8xf32, #tpu.memory_space<vmem>>, vector<1x8xf32>
    %6 = vector.broadcast %5 : vector<1x8xf32> to vector<8x8xf32>
    %7 = arith.mulf %4, %6 : vector<8x8xf32>
    %cst_6 = arith.constant dense<0.000000e+00> : vector<8xf32>
    %8 = vector.multi_reduction <add>, %7, %cst_6 [1] : vector<8x8xf32> to vector<8xf32>
    %9 = vector.shape_cast %8 : vector<8xf32> to vector<8x1xf32>
    %c0_7 = arith.constant 0 : index
    %c0_8 = arith.constant 0 : index
    %10 = vector.load %arg4[%c0_7, %c0_8] : memref<8x1xf32, #tpu.memory_space<vmem>>, vector<8x1xf32>
    tpu.vector_store %arg4[%c0_7, %c0_8], %9 {strides = array<i32>} : memref<8x1xf32, #tpu.memory_space<vmem>>, vector<8x1xf32>,
    return
  }
  func.func @transform_0(%arg0: i32) -> (i32, i32) {
    %c0_i32 = arith.constant 0 : i32
    %c0_i32_0 = arith.constant 0 : i32
    return %arg0, %c0_i32 : i32, i32
  }
  func.func @transform_1(%arg0: i32) -> (i32, i32) {
    %c0_i32 = arith.constant 0 : i32
    %c0_i32_0 = arith.constant 0 : i32
    %c0_i32_1 = arith.constant 0 : i32
    return %c0_i32, %c0_i32_0 : i32, i32
  }
  func.func @transform_2(%arg0: i32) -> (i32, i32) {
    %c0_i32 = arith.constant 0 : i32
    %c0_i32_0 = arith.constant 0 : i32
    %c0_i32_1 = arith.constant 0 : i32
    return %c0_i32, %c0_i32_0 : i32, i32
  }
  func.func @transform_3(%arg0: i32) -> (i32, i32) {
    %c0_i32 = arith.constant 0 : i32
    %c0_i32_0 = arith.constant 0 : i32
    return %arg0, %c0_i32 : i32, i32
  }
}

</mosaic_0001>

<llo_original>
// kernel: tpu_custom_call.1
$region0: #{tpu_custom_call.1}
  #allocation0 [shape = 'u32[]', space=smem, size = 0x4, offset = 0x4, fixed_abs, tag = 'smem constant byte address 0x4 - core index']
  #allocation1 [shape = 'u32[144,128]{1,0:T(1,128)}', space=vmem, size = 0x12000, scoped, tag = 'internal scratch']
  %s0 = inlined_call_operand.vmem [shape: f32[8,32], index: 0, kind: input, shape index: {}]
  %s1 = inlined_call_operand.vmem [shape: f32[32,8], index: 1, kind: input, shape index: {}]
  %s2 = inlined_call_operand.vmem [shape: f32[1,8], index: 2, kind: input, shape index: {}]
  %s3 = inlined_call_operand.vmem [shape: f32[8,1], index: 3, kind: output, shape index: {}]
  %s4 = sld [smem:[#allocation0]]
  $region22: #{tpu_custom_call.1} parent=0
    _
  %s6 = ssub.s32 1, %s4
  %s7 = scalar_select 0, %s6, %s4
  // Predicated region
  $region2: #{tpu_custom_call.1} parent=0 // pred_check
    _
  $region3: #{tpu_custom_call.1} parent=0 // pred_check_branch
    %9 = sbr.rel (0) target = $region5
  $region4: #{tpu_custom_call.1} parent=0 // pred_region
    _
  $region5: #{tpu_custom_call.1} parent=0 // pred_fallthru
    _
  // Predicated region
  $region6: #{tpu_custom_call.1} parent=0 // pred_check
    _
  $region7: #{tpu_custom_call.1} parent=0 // pred_check_branch
    %11 = sbr.rel (0) target = $region9
  $region8: #{tpu_custom_call.1} parent=0 // pred_region
    _
  $region9: #{tpu_custom_call.1} parent=0 // pred_fallthru
    _
  // Predicated region
  $region10: #{tpu_custom_call.1} parent=0 // pred_check
    _
  $region11: #{tpu_custom_call.1} parent=0 // pred_check_branch
    %13 = sbr.rel (0) target = $region13
  $region12: #{tpu_custom_call.1} parent=0 // pred_region
    _
  $region13: #{tpu_custom_call.1} parent=0 // pred_fallthru
    _
  %v14 = vld [vmem:[%s0] sm:$0xff]
  %v15 = vld [vmem:[%s1] sm:$0xff]
  %v16 = vld [vmem:[%s1 + $0x8] sm:$0xff]
  %v17 = vld [vmem:[%s1 + $0x10] sm:$0xff]
  %v18 = vld [vmem:[%s1 + $0x18] sm:$0xff]
  %vm19 = vcmask 261120
  %v21 = vsel %vm19, %v14, 0
  %23 = vmatprep.subr.mxu0 0.0
  %24 = vmatpush1.msra.mxu0 0.0
  %25 = vmatprep.subr.mxu0 0.0
  %26 = vmatpush1.msra.mxu0 0.0
  %27 = vmatprep.subr.mxu0 0.0
  %28 = vmatpush1.msra.mxu0 0.0
  %29 = vmatprep.subr.mxu0 0.0
  %30 = vmatpush1.msra.mxu0 0.0
  %31 = vmatprep.subr.mxu0 0.0
  %32 = vmatpush1.msra.mxu0 0.0
  %33 = vmatprep.subr.mxu0 0.0
  %34 = vmatpush1.msra.mxu0 0.0
  %35 = vmatprep.subr.mxu0 0.0
  %36 = vmatpush1.msra.mxu0 0.0
  %37 = vmatprep.subr.mxu0 0.0
  %38 = vmatpush1.msra.mxu0 0.0
  %39 = vmatprep.subr.mxu0 0.0
  %40 = vmatpush1.msra.mxu0 0.0
  %41 = vmatprep.subr.mxu0 0.0
  %42 = vmatpush1.msra.mxu0 0.0
  %43 = vmatprep.subr.mxu0 0.0
  %44 = vmatpush1.msra.mxu0 0.0
  %45 = vmatprep.subr.mxu0 0.0
  %46 = vmatpush1.msra.mxu0 0.0
  %47 = vmatprep.subr.mxu0 0.0
  %48 = vmatpush1.msra.mxu0 %v18
  %49 = vmatprep.subr.mxu0 0.0
  %50 = vmatpush1.msra.mxu0 %v17
  %51 = vmatprep.subr.mxu0 0.0
  %52 = vmatpush1.msra.mxu0 %v16
  %53 = vmatprep.subr.mxu0 0.0
  %54 = vmatpush1.msra.mxu0 %v15
  %55 = vmatprep.subr.mxu0 0.0
  %56 = vmatpush2.msra.mxu0 0.0
  %57 = vmatprep.subr.mxu0 0.0
  %58 = vmatpush2.msra.mxu0 0.0
  %59 = vmatprep.subr.mxu0 0.0
  %60 = vmatpush2.msra.mxu0 0.0
  %61 = vmatprep.subr.mxu0 0.0
  %62 = vmatpush2.msra.mxu0 0.0
  %63 = vmatprep.subr.mxu0 0.0
  %64 = vmatpush2.msra.mxu0 0.0
  %65 = vmatprep.subr.mxu0 0.0
  %66 = vmatpush2.msra.mxu0 0.0
  %67 = vmatprep.subr.mxu0 0.0
  %68 = vmatpush2.msra.mxu0 0.0
  %69 = vmatprep.subr.mxu0 0.0
  %70 = vmatpush2.msra.mxu0 0.0
  %71 = vmatprep.subr.mxu0 0.0
  %72 = vmatpush2.msra.mxu0 0.0
  %73 = vmatprep.subr.mxu0 0.0
  %74 = vmatpush2.msra.mxu0 0.0
  %75 = vmatprep.subr.mxu0 0.0
  %76 = vmatpush2.msra.mxu0 0.0
  %77 = vmatprep.subr.mxu0 0.0
  %78 = vmatpush2.msra.mxu0 0.0
  %79 = vmatprep.subr.mxu0 0.0
  %80 = vmatpush2.msra.mxu0 0.0
  %81 = vmatprep.subr.mxu0 0.0
  %82 = vmatpush2.msra.mxu0 0.0
  %83 = vmatprep.subr.mxu0 0.0
  %84 = vmatpush2.msra.mxu0 0.0
  %85 = vmatprep.subr.mxu0 0.0
  %86 = vmatpush2.msra.mxu0 0.0
  %87 = vmatprep.mubr.f32.mxu0 0.0
  %88 = vmatmul.mubr.f32.gmra.mxu0 %v21
  %v89 = vpop.f32.mrf.mxu0
  %v90 = vadd.f32 0.0, %v89
  %v91 = vpop.f32.mrf.mxu0
  %92 = vdwg.mxu0
  %v93 = vmax.f32 %v90, 0.0
  %v94 = vld [vmem:[%s2] sm:$0x1]
  %v96 = vlaneseq
  %v97 = vshrl.u32 %v96, 7
  %v98 = vsub.s32 0, %v97
  %v99 = vrot.slane %v94, %v98
  %v101 = vmul.f32 %v93, %v99
  %vm102 = vcmask 64512
  %v103 = vsel %vm102, %v101, 0.0
  %104 = vadd.xlane.f32.xlu0 %v103
  %v105 = vpop.xlane.xlu0 %104
  %vm106 = vcmask 7168
  %107 = vst.msk [vmem:[%s3] sm:$0xff] %vm106, %v105
  // Predicated region
  $region14: #{tpu_custom_call.1} parent=0 // pred_check
    _
  $region15: #{tpu_custom_call.1} parent=0 // pred_check_branch
    %109 = sbr.rel (0) target = $region17
  $region16: #{tpu_custom_call.1} parent=0 // pred_region
    _
  $region17: #{tpu_custom_call.1} parent=0 // pred_fallthru
    _
  // Predicated region
  $region18: #{tpu_custom_call.1} parent=0 // pred_check
    _
  $region19: #{tpu_custom_call.1} parent=0 // pred_check_branch
    %111 = sbr.rel (0) target = $region21
  $region20: #{tpu_custom_call.1} parent=0 // pred_region
    _
  $region21: #{tpu_custom_call.1} parent=0 // pred_fallthru
    _

</llo_original>
